<compile_context>
chip_gen: v6e
topology: v6e:2x2x1
jax: 0.10.0
libtpu: 0.0.40
codegen_flags: <defaults>
</compile_context>

<pallas_src>
import functools

import jax
import jax.numpy as jnp
from jax.experimental import pallas as pl
from jax.experimental.pallas import tpu as pltpu


def _head_kernel(inv_t_ref, w_ref, b_ref, x_ref, logits_ref, numer_ref, *, bn):
    # inv_t_ref:  (1,)            SMEM scalar 1/T
    # w_ref:      (NCLS, Cin)     VMEM (resident across the grid)
    # b_ref:      (NCLS, 1)       VMEM (resident across the grid)
    # x_ref:      (bn, Cin, thw)  VMEM activation tile (space on the lane axis)
    # logits_ref: (bn, NCLS, thw) VMEM
    # numer_ref:  (bn, NCLS, thw) VMEM
    inv_t = inv_t_ref[0]
    w = w_ref[...]
    b = b_ref[...]
    for i in range(bn):  # bn is small & static -> fully unrolled 2-D MXU dots
        acc = jnp.dot(w, x_ref[i], preferred_element_type=jnp.float32)
        numer = acc + b                       # bias broadcast over spatial lanes
        numer_ref[i] = numer.astype(numer_ref.dtype)
        logits_ref[i] = (numer * inv_t).astype(logits_ref.dtype)


def _round_up(x, m):
    return ((x + m - 1) // m) * m


def _largest_aligned_divisor(total, cap):
    """Largest multiple of 128 that divides `total` and is <= cap (total%128==0)."""
    t = min(cap, total)
    t -= t % 128
    while t >= 128:
        if total % t == 0:
            return t
        t -= 128
    return 128


def _pick_tiles(n, cin, hw_pad, thw_cap, x_tile_budget_bytes, bn_cap=16):
    """Pick (batch-block, spatial-tile) sizes.

    thw: largest 128-aligned divisor of hw_pad, capped (generation-tunable).
    bn:  largest divisor of n (<= bn_cap) whose x tile fits the per-step budget
         -- this is what keeps small-feature-map cases off the per-step
         overhead floor.
    Also guarantees >= 2 grid points whenever possible (v7x megacore).
    """
    thw = _largest_aligned_divisor(hw_pad, thw_cap)
    bn = 1
    for d in range(min(n, bn_cap), 0, -1):
        if n % d == 0 and d * cin * thw * 4 <= x_tile_budget_bytes:
            bn = d
            break
    if (n // bn) * (hw_pad // thw) < 2:
        if n // bn == 1 and n > 1:
            for d in range(n // 2, 0, -1):
                if n % d == 0:
                    bn = d
                    break
        elif hw_pad // thw == 1 and hw_pad >= 256:
            thw = _largest_aligned_divisor(hw_pad, hw_pad // 2)
    return bn, thw


@functools.partial(jax.jit, static_argnames=("thw_cap", "x_tile_budget_bytes"))
def baseline_temperature_semseg_forward(
    x_nchw, weight, bias, T, thw_cap=8192, x_tile_budget_bytes=4 << 20):
    """Forward pass of BaselineTemperatureSemSegNet (underlying_model == identity).

    Args:
      x_nchw: (N, Cin, H, W) float32 -- penultimate representations.
      weight: (NCLS, Cin) float32 -- 1x1 conv weight (PyTorch (NCLS,Cin,1,1) squeezed).
      bias:   (NCLS,) float32.
      T:      scalar temperature.
      thw_cap: max spatial lanes per grid step (tune per TPU generation:
               8192 is safe on v5e/v6e/v7x; 16384 is viable on v6e/v7x).
      x_tile_budget_bytes: per-step x-tile budget used to pick the batch block.
    Returns:
      (logits, logit_numerators), each (N, NCLS, H, W) float32.
    """
    N, Cin, H, W = x_nchw.shape
    NCLS = weight.shape[0]
    HW = H * W
    HW_pad = _round_up(HW, 128)

    bn, thw = _pick_tiles(N, Cin, HW_pad, thw_cap, x_tile_budget_bytes)

    x3 = x_nchw.reshape(N, Cin, HW)                 # free, NCHW-contiguous view
    if HW_pad != HW:
        # TODO(synk): a masked last tile would avoid this extra pad copy for
        # ragged spatial sizes; padding keeps lane alignment & bounds VMEM.
        x3 = jnp.pad(x3, ((0, 0), (0, 0), (0, HW_pad - HW)))

    bias2d = bias.reshape(NCLS, 1)
    inv_t = (1.0 / jnp.asarray(T, jnp.float32)).reshape(1,)

    grid = (N // bn, HW_pad // thw)

    # Explicit VMEM budget: double-buffered x + both (double-buffered) outputs
    # + resident weight/bias + margin.  Capped at 64 MiB (v7x physical VMEM).
    x_tile_bytes = bn * Cin * thw * 4
    out_tile_bytes = bn * NCLS * thw * 4
    vmem_need = (2 * x_tile_bytes + 4 * out_tile_bytes
                 + NCLS * Cin * 4 + NCLS * 128 * 4 + (2 << 20))
    vmem_limit = int(min(max(vmem_need, 16 << 20), 64 << 20))

    cost = pl.CostEstimate(
        flops=2 * N * HW_pad * Cin * NCLS,
        transcendentals=0,
        bytes_accessed=(N * HW_pad * Cin * 4 + 2 * N * HW_pad * NCLS * 4
                        + Cin * NCLS * 4),
    )

    kernel = functools.partial(_head_kernel, bn=bn)

    # NOTE: if profiling shows gaps between consecutive input DMAs, add
    # pipeline_mode=pl.Buffered(3) to the x BlockSpec (costs one extra x tile
    # of VMEM); otherwise double-buffering is sufficient for this HBM-bound op.
    logits3, numer3 = pl.pallas_call(
        kernel,
        out_shape=(
            jax.ShapeDtypeStruct((N, NCLS, HW_pad), jnp.float32),
            jax.ShapeDtypeStruct((N, NCLS, HW_pad), jnp.float32),
        ),
        grid_spec=pltpu.PrefetchScalarGridSpec(
            num_scalar_prefetch=0,
            grid=grid,
            in_specs=[
                pl.BlockSpec(memory_space=pltpu.SMEM),                   # 1/T
                pl.BlockSpec((NCLS, Cin), lambda nb, j: (0, 0)),         # weight (resident)
                pl.BlockSpec((NCLS, 1), lambda nb, j: (0, 0)),           # bias (resident)
                pl.BlockSpec((bn, Cin, thw), lambda nb, j: (nb, 0, j)),  # x tile
            ],
            out_specs=[
                pl.BlockSpec((bn, NCLS, thw), lambda nb, j: (nb, 0, j)),
                pl.BlockSpec((bn, NCLS, thw), lambda nb, j: (nb, 0, j)),
            ],
        ),
        compiler_params=pltpu.CompilerParams(
            dimension_semantics=("parallel", "parallel"),
            vmem_limit_bytes=vmem_limit),
        cost_estimate=cost,
    )(inv_t, weight, bias2d, x3)

    if HW_pad != HW:
        logits3 = logits3[:, :, :HW]
        numer3 = numer3[:, :, :HW]

    # (N, NCLS, HW) -> (N, NCLS, H, W): contiguous reshape, no transpose.
    return logits3.reshape(N, NCLS, H, W), numer3.reshape(N, NCLS, H, W)


if __name__ == "__main__":
    # Small shapes consistent with the module: in_features=128 (module default),
    # num_classes=8, batch=2, spatial=16x16.
    N, Cin, H, W = 2, 128, 16, 16
    NCLS = 8
    T = 2.0

    key = jax.random.PRNGKey(0)
    kx, kw = jax.random.split(key)

    x = jax.random.normal(kx, (N, Cin, H, W), dtype=jnp.float32)

    # kaiming_normal_ with nonlinearity='relu': std = sqrt(2 / fan_in),
    # fan_in = Cin * 1 * 1 for a (NCLS, Cin, 1, 1) conv weight.
    std = (2.0 / Cin) ** 0.5
    weight_oihw = jax.random.normal(kw, (NCLS, Cin, 1, 1), dtype=jnp.float32) * std
    weight = weight_oihw[:, :, 0, 0]                          # (NCLS, Cin)
    bias = jnp.zeros((NCLS,), dtype=jnp.float32)              # InnerSemSegHead zeroes bias

    logits, logit_numerators = baseline_temperature_semseg_forward(
        x, weight, bias, T)
    jax.block_until_ready((logits, logit_numerators))

    # Lightweight sanity check against pure-JAX reference of the same math.
    # (Kernel computes numer * (1/T); torch divides by T -- differs by <=1 ulp.)
    ref_numer = jnp.einsum("nchw,kc->nkhw", x, weight) + bias.reshape(1, NCLS, 1, 1)
    ref_logits = ref_numer / T
    assert jnp.allclose(logit_numerators, ref_numer, atol=1e-4, rtol=1e-4)
    assert jnp.allclose(logits, ref_logits, atol=1e-4, rtol=1e-4)
    assert logits.shape == (N, NCLS, H, W)
    assert logit_numerators.shape == (N, NCLS, H, W)

    print("KERNEL_OK")
</pallas_src>

<mosaic_0001>
module attributes {stable_mosaic.version = 11 : i64} {
  func.func @_head_kernel(%arg0: i32, %arg1: i32, %arg2: memref<1xf32, #tpu.memory_space<smem>>, %arg3: memref<8x128xf32, #tpu.memory_space<vmem>>, %arg4: memref<8x1xf32, #tpu.memory_space<vmem>>, %arg5: memref<1x128x256xf32, #tpu.memory_space<vmem>>, %arg6: memref<1x8x256xf32, #tpu.memory_space<vmem>>, %arg7: memref<1x8x256xf32, #tpu.memory_space<vmem>>) attributes {dimension_semantics = [#tpu.dimension_semantics<parallel>, #tpu.dimension_semantics<parallel>], iteration_bounds = array<i64: 2, 1>, scalar_prefetch = 0 : i64, scratch_operands = 0 : i64, tpu.core_type = #tpu.core_type<tc>, window_params = [{transform_indices = @transform_0, window_bounds = array<i64: 1>}, {pipeline_mode = #tpu.pipeline_mode<synchronous>, transform_indices = @transform_1, window_bounds = array<i64: 8, 128>}, {pipeline_mode = #tpu.pipeline_mode<synchronous>, transform_indices = @transform_2, window_bounds = array<i64: 8, 1>}, {transform_indices = @transform_3, window_bounds = array<i64: 1, 128, 256>}, {transform_indices = @transform_4, window_bounds = array<i64: 1, 8, 256>}, {transform_indices = @transform_5, window_bounds = array<i64: 1, 8, 256>}]} {
    %c0 = arith.constant 0 : index
    %0 = memref.load %arg2[%c0] : memref<1xf32, #tpu.memory_space<smem>>
    %c0_0 = arith.constant 0 : index
    %c0_1 = arith.constant 0 : index
    %1 = vector.load %arg3[%c0_0, %c0_1] : memref<8x128xf32, #tpu.memory_space<vmem>>, vector<8x128xf32>
    %c0_2 = arith.constant 0 : index
    %c0_3 = arith.constant 0 : index
    %2 = vector.load %arg4[%c0_2, %c0_3] : memref<8x1xf32, #tpu.memory_space<vmem>>, vector<8x1xf32>
    %c0_4 = arith.constant 0 : index
    %c0_5 = arith.constant 0 : index
    %c0_6 = arith.constant 0 : index
    %3 = vector.load %arg5[%c0_4, %c0_5, %c0_6] : memref<1x128x256xf32, #tpu.memory_space<vmem>>, vector<1x128x256xf32>
    %4 = vector.shape_cast %3 : vector<1x128x256xf32> to vector<128x256xf32>
    %cst = arith.constant dense<0.000000e+00> : vector<8x256xf32>
    %5 = tpu.matmul %1, %4, %cst {dimension_numbers = #tpu.dot_dimension_numbers<[1], [0], [0], [1], [0, 0, 1, 1], [], []>} : vector<8x128xf32>, vector<128x256xf32>, vector<8x256xf32> -> vector<8x256xf32>
    %6 = vector.broadcast %2 : vector<8x1xf32> to vector<8x256xf32>
    %7 = arith.addf %5, %6 : vector<8x256xf32>
    %c0_7 = arith.constant 0 : index
    %c0_8 = arith.constant 0 : index
    %c0_9 = arith.constant 0 : index
    %8 = vector.load %arg7[%c0_7, %c0_8, %c0_9] : memref<1x8x256xf32, #tpu.memory_space<vmem>>, vector<1x8x256xf32>
    %9 = vector.shape_cast %8 : vector<1x8x256xf32> to vector<8x256xf32>
    %10 = vector.shape_cast %7 : vector<8x256xf32> to vector<1x8x256xf32>
    tpu.vector_store %arg7[%c0_7, %c0_8, %c0_9], %10 {strides = array<i32>} : memref<1x8x256xf32, #tpu.memory_space<vmem>>, vector<1x8x256xf32>,
    %11 = vector.broadcast %0 : f32 to vector<8x256xf32>
    %12 = arith.mulf %7, %11 : vector<8x256xf32>
    %c0_10 = arith.constant 0 : index
    %c0_11 = arith.constant 0 : index
    %c0_12 = arith.constant 0 : index
    %13 = vector.load %arg6[%c0_10, %c0_11, %c0_12] : memref<1x8x256xf32, #tpu.memory_space<vmem>>, vector<1x8x256xf32>
    %14 = vector.shape_cast %13 : vector<1x8x256xf32> to vector<8x256xf32>
    %15 = vector.shape_cast %12 : vector<8x256xf32> to vector<1x8x256xf32>
    tpu.vector_store %arg6[%c0_10, %c0_11, %c0_12], %15 {strides = array<i32>} : memref<1x8x256xf32, #tpu.memory_space<vmem>>, vector<1x8x256xf32>,
    return
  }
  func.func @transform_0(%arg0: i32, %arg1: i32) -> i32 {
    %c0_i32 = arith.constant 0 : i32
    %c0_i32_0 = arith.constant 0 : i32
    return %c0_i32 : i32
  }
  func.func @transform_1(%arg0: i32, %arg1: i32) -> (i32, i32) {
    %c0_i32 = arith.constant 0 : i32
    %c0_i32_0 = arith.constant 0 : i32
    %c0_i32_1 = arith.constant 0 : i32
    return %c0_i32, %c0_i32_0 : i32, i32
  }
  func.func @transform_2(%arg0: i32, %arg1: i32) -> (i32, i32) {
    %c0_i32 = arith.constant 0 : i32
    %c0_i32_0 = arith.constant 0 : i32
    %c0_i32_1 = arith.constant 0 : i32
    return %c0_i32, %c0_i32_0 : i32, i32
  }
  func.func @transform_3(%arg0: i32, %arg1: i32) -> (i32, i32, i32) {
    %c0_i32 = arith.constant 0 : i32
    %c0_i32_0 = arith.constant 0 : i32
    return %arg0, %c0_i32, %arg1 : i32, i32, i32
  }
  func.func @transform_4(%arg0: i32, %arg1: i32) -> (i32, i32, i32) {
    %c0_i32 = arith.constant 0 : i32
    %c0_i32_0 = arith.constant 0 : i32
    return %arg0, %c0_i32, %arg1 : i32, i32, i32
  }
  func.func @transform_5(%arg0: i32, %arg1: i32) -> (i32, i32, i32) {
    %c0_i32 = arith.constant 0 : i32
    %c0_i32_0 = arith.constant 0 : i32
    return %arg0, %c0_i32, %arg1 : i32, i32, i32
  }
}

</mosaic_0001>

<llo_original>
// kernel: baseline_temperature_semseg_forward.1
$region0: #{baseline_temperature_semseg_forward.1}
  #allocation0 [shape = 'u32[]', space=smem, size = 0x4, offset = 0x4, fixed_abs, tag = 'smem constant byte address 0x4 - core index']
  #allocation1 [shape = 'u32[144,128]{1,0:T(1,128)}', space=vmem, size = 0x12000, scoped, tag = 'internal scratch']
  #allocation2 [shape = 'f32[1]{0:T(128)S(6)}', space=smem, size = 0x200, scoped, tag = 'scoped memory for baseline_temperature_semseg_forward.1']
  %s0 = inlined_call_operand.<no memory space> [shape: f32[1], index: 0, kind: input, shape index: {}]
  %s1 = inlined_call_operand.vmem [shape: f32[8,128], index: 1, kind: input, shape index: {}]
  %s2 = inlined_call_operand.vmem [shape: f32[8,1], index: 2, kind: input, shape index: {}]
  %s3 = inlined_call_operand.vmem [shape: f32[2,128,256], index: 3, kind: input, shape index: {}]
  %s4 = inlined_call_operand.vmem [shape: f32[2,8,256], index: 4, kind: output, shape index: {0}]
  %s5 = inlined_call_operand.vmem [shape: f32[2,8,256], index: 5, kind: output, shape index: {1}]
  %6 = xla_tuple %s4, %s5
  %s7 = sld [smem:[#allocation0]]
  $region57: #{baseline_temperature_semseg_forward.1} parent=0
    _
  %s9 = ssub.s32 1, %s7
  %s10 = scalar_select 0, %s9, %s7
  %11 = sst [smem:[#allocation2]] %s0
  loop: start=0, step=1, limit=4
  $region2: #{baseline_temperature_semseg_forward.1} parent=0 // loop_pre_header
    _
  $region3: #{baseline_temperature_semseg_forward.1} parent=0 // loop_header
    %s13 = sphi 0, %s17
    %p14 = scmp.ge.s32.totalorder %s13, 4
    %s20 = sphi 0, %s32
    %s21 = sphi 0, %s28
    %s22 = sphi 0, %s20
    %s23 = sphi 0, %s21
    %s24 = sphi 0, %s22
    %s25 = sphi 0, %s23
    %s33 = sphi 0, %s33
    %s35 = sphi 0, %s33
    %s36 = sphi 0, %s35
    %s50 = sphi 0, %s36
    %s54 = sphi 0, %s54
    %s56 = sphi 0, %s54
    %s57 = sphi 0, %s56
    %s71 = sphi 0, %s57
    %s75 = sphi 0, %s75
    %s77 = sphi 0, %s75
    %s78 = sphi 0, %s77
    %s92 = sphi 0, %s78
    %s100 = sphi 0, %s102
    %s103 = sphi 0, %s100
    %s104 = sphi 0, %s103
    %s120 = sphi 0, %s104
    %s128 = sphi 0, %s130
    %s131 = sphi 0, %s128
    %s132 = sphi 0, %s131
    %s148 = sphi 0, %s132
    %s156 = sphi 0, %s158
    %s159 = sphi 0, %s156
    %s160 = sphi 0, %s159
    %s176 = sphi 0, %s160
  $region4: #{baseline_temperature_semseg_forward.1} parent=0 // loop_header_branch
    %16 = sbr.rel (%p14) target = $region8
  $region5: #{baseline_temperature_semseg_forward.1} parent=0 // loop_body
    %s18 = ssub.s32 %s13, 1
    %s19 = ssub.s32 %s13, 2
    %s26 = sadd.s32 1, %s21
    %p27 = scmp.ge.s32.totalorder %s26, 1
    %s28 = scalar_select %p27, 0, %s26
    %s29 = sadd.s32 1, %s20
    %s30 = scalar_select %p27, %s29, %s20
    %p31 = scmp.ge.s32.totalorder %s30, 2
    %s32 = scalar_select %p31, 0, %s30
    %s34 = sadd.s32 %s33, 1
    %p37 = scmp.eq.s32.totalorder %s13, 1
    %p38 = scmp.ne.s32.totalorder %s33, %s35
    %p39 = scmp.eq.s32.totalorder %s13, 0
    %p40 = por %p38, %p39
    %p41 = scmp.ne.s32.totalorder %s33, %s35
    %p42 = scmp.eq.s32.totalorder %s18, 1
    %p43 = por %p41, %p42
    %p44 = scmp.ne.s32.totalorder %s35, %s36
    %p45 = scmp.eq.s32.totalorder %s18, 0
    %p46 = por %p44, %p45
    %p47 = scmp.ne.s32.totalorder %s35, %s36
    %p48 = scmp.eq.s32.totalorder %s19, 1
    %p49 = por %p47, %p48
    %p51 = scmp.ne.s32.totalorder %s36, %s50
    %p52 = scmp.eq.s32.totalorder %s19, 0
    %p53 = por %p51, %p52
    %s55 = sadd.s32 %s54, 1
    %p58 = scmp.eq.s32.totalorder %s13, 1
    %p59 = scmp.ne.s32.totalorder %s54, %s56
    %p60 = scmp.eq.s32.totalorder %s13, 0
    %p61 = por %p59, %p60
    %p62 = scmp.ne.s32.totalorder %s54, %s56
    %p63 = scmp.eq.s32.totalorder %s18, 1
    %p64 = por %p62, %p63
    %p65 = scmp.ne.s32.totalorder %s56, %s57
    %p66 = scmp.eq.s32.totalorder %s18, 0
    %p67 = por %p65, %p66
    %p68 = scmp.ne.s32.totalorder %s56, %s57
    %p69 = scmp.eq.s32.totalorder %s19, 1
    %p70 = por %p68, %p69
    %p72 = scmp.ne.s32.totalorder %s57, %s71
    %p73 = scmp.eq.s32.totalorder %s19, 0
    %p74 = por %p72, %p73
    %s76 = sadd.s32 %s75, 1
    %p79 = scmp.eq.s32.totalorder %s13, 1
    %p80 = scmp.ne.s32.totalorder %s75, %s77
    %p81 = scmp.eq.s32.totalorder %s13, 0
    %p82 = por %p80, %p81
    %p83 = scmp.ne.s32.totalorder %s75, %s77
    %p84 = scmp.eq.s32.totalorder %s18, 1
    %p85 = por %p83, %p84
    %p86 = scmp.ne.s32.totalorder %s77, %s78
    %p87 = scmp.eq.s32.totalorder %s18, 0
    %p88 = por %p86, %p87
    %p89 = scmp.ne.s32.totalorder %s77, %s78
    %p90 = scmp.eq.s32.totalorder %s19, 1
    %p91 = por %p89, %p90
    %p93 = scmp.ne.s32.totalorder %s78, %s92
    %p94 = scmp.eq.s32.totalorder %s19, 0
    %p95 = por %p93, %p94
    %s96 = ssub.s32 %s20, %s32
    %s97 = ssub.s32 %s21, %s28
    %s98 = sor.u32 %s96, %s97
    %p99 = scmp.eq.s32.totalorder %s98, 0
    %s101 = sadd.s32 %s100, 1
    %s102 = scalar_select %p99, %s100, %s101
    %p105 = pneg %p99
    %p106 = scmp.eq.s32.totalorder %s13, 1
    %p107 = por %p105, %p106
    %p108 = scmp.ne.s32.totalorder %s100, %s103
    %p109 = scmp.eq.s32.totalorder %s13, 0
    %p110 = por %p108, %p109
    %p111 = scmp.ne.s32.totalorder %s100, %s103
    %p112 = scmp.eq.s32.totalorder %s18, 1
    %p113 = por %p111, %p112
    %p114 = scmp.ne.s32.totalorder %s103, %s104
    %p115 = scmp.eq.s32.totalorder %s18, 0
    %p116 = por %p114, %p115
    %p117 = scmp.ne.s32.totalorder %s103, %s104
    %p118 = scmp.eq.s32.totalorder %s19, 1
    %p119 = por %p117, %p118
    %p121 = scmp.ne.s32.totalorder %s104, %s120
    %p122 = scmp.eq.s32.totalorder %s19, 0
    %p123 = por %p121, %p122
    %s124 = ssub.s32 %s20, %s32
    %s125 = ssub.s32 %s21, %s28
    %s126 = sor.u32 %s124, %s125
    %p127 = scmp.eq.s32.totalorder %s126, 0
    %s129 = sadd.s32 %s128, 1
    %s130 = scalar_select %p127, %s128, %s129
    %p133 = pneg %p127
    %p134 = scmp.eq.s32.totalorder %s13, 1
    %p135 = por %p133, %p134
    %p136 = scmp.ne.s32.totalorder %s128, %s131
    %p137 = scmp.eq.s32.totalorder %s13, 0
    %p138 = por %p136, %p137
    %p139 = scmp.ne.s32.totalorder %s128, %s131
    %p140 = scmp.eq.s32.totalorder %s18, 1
    %p141 = por %p139, %p140
    %p142 = scmp.ne.s32.totalorder %s131, %s132
    %p143 = scmp.eq.s32.totalorder %s18, 0
    %p144 = por %p142, %p143
    %p145 = scmp.ne.s32.totalorder %s131, %s132
    %p146 = scmp.eq.s32.totalorder %s19, 1
    %p147 = por %p145, %p146
    %p149 = scmp.ne.s32.totalorder %s132, %s148
    %p150 = scmp.eq.s32.totalorder %s19, 0
    %p151 = por %p149, %p150
    %s152 = ssub.s32 %s20, %s32
    %s153 = ssub.s32 %s21, %s28
    %s154 = sor.u32 %s152, %s153
    %p155 = scmp.eq.s32.totalorder %s154, 0
    %s157 = sadd.s32 %s156, 1
    %s158 = scalar_select %p155, %s156, %s157
    %p161 = pneg %p155
    %p162 = scmp.eq.s32.totalorder %s13, 1
    %p163 = por %p161, %p162
    %p164 = scmp.ne.s32.totalorder %s156, %s159
    %p165 = scmp.eq.s32.totalorder %s13, 0
    %p166 = por %p164, %p165
    %p167 = scmp.ne.s32.totalorder %s156, %s159
    %p168 = scmp.eq.s32.totalorder %s18, 1
    %p169 = por %p167, %p168
    %p170 = scmp.ne.s32.totalorder %s159, %s160
    %p171 = scmp.eq.s32.totalorder %s18, 0
    %p172 = por %p170, %p171
    %p173 = scmp.ne.s32.totalorder %s159, %s160
    %p174 = scmp.eq.s32.totalorder %s19, 1
    %p175 = por %p173, %p174
    %p177 = scmp.ne.s32.totalorder %s160, %s176
    %p178 = scmp.eq.s32.totalorder %s19, 0
    %p179 = por %p177, %p178
    %p180 = scmp.le.s32.totalorder 1, %s13
    %p181 = scmp.lt.s32.totalorder %s13, 3
    %p182 = pnand %p180, %p181
    %p183 = pneg %p182
    // Predicated region
    $region9: #{baseline_temperature_semseg_forward.1} parent=5 // pred_check
      _
    $region10: #{baseline_temperature_semseg_forward.1} parent=5 // pred_check_branch
      %185 = sbr.rel (%p182) target = $region12
    $region11: #{baseline_temperature_semseg_forward.1} parent=5 // pred_region
      %s186 = ssub.s32 %s13, 1
      // Predicated region
      $region13: #{baseline_temperature_semseg_forward.1} parent=11 // pred_check
        %p187 = pneg %p46
      $region14: #{baseline_temperature_semseg_forward.1} parent=11 // pred_check_branch
        %189 = sbr.rel (%p187) target = $region16
      $region15: #{baseline_temperature_semseg_forward.1} parent=11 // pred_region
        _
      $region16: #{baseline_temperature_semseg_forward.1} parent=11 // pred_fallthru
        _
      // Predicated region
      $region17: #{baseline_temperature_semseg_forward.1} parent=11 // pred_check
        %p190 = pneg %p67
      $region18: #{baseline_temperature_semseg_forward.1} parent=11 // pred_check_branch
        %192 = sbr.rel (%p190) target = $region20
      $region19: #{baseline_temperature_semseg_forward.1} parent=11 // pred_region
        _
      $region20: #{baseline_temperature_semseg_forward.1} parent=11 // pred_fallthru
        _
      // Predicated region
      $region21: #{baseline_temperature_semseg_forward.1} parent=11 // pred_check
        %p193 = pneg %p88
      $region22: #{baseline_temperature_semseg_forward.1} parent=11 // pred_check_branch
        %195 = sbr.rel (%p193) target = $region24
      $region23: #{baseline_temperature_semseg_forward.1} parent=11 // pred_region
        _
      $region24: #{baseline_temperature_semseg_forward.1} parent=11 // pred_fallthru
        _
    $region12: #{baseline_temperature_semseg_forward.1} parent=5 // pred_fallthru
      _
    %p196 = scmp.lt.s32.totalorder %s13, 2
    // Predicated region
    $region25: #{baseline_temperature_semseg_forward.1} parent=5 // pred_check
      %p197 = pneg %p196
    $region26: #{baseline_temperature_semseg_forward.1} parent=5 // pred_check_branch
      %199 = sbr.rel (%p197) target = $region28
    $region27: #{baseline_temperature_semseg_forward.1} parent=5 // pred_region
      // Predicated region
      $region29: #{baseline_temperature_semseg_forward.1} parent=27 // pred_check
        %p200 = pneg %p110
      $region30: #{baseline_temperature_semseg_forward.1} parent=27 // pred_check_branch
        %202 = sbr.rel (%p200) target = $region32
      $region31: #{baseline_temperature_semseg_forward.1} parent=27 // pred_region
        %s203 = smul.u32 2, %s21
        %p204 = scmp.lt.s32.totalorder %s20, 1
        %s205 = scalar_select %p204, %s20, 1
        %p206 = scmp.lt.s32.totalorder %s203, 1
        %s207 = scalar_select %p206, %s203, 1
        %s208 = smul.addr %s205, 32
        %s209 = sadd.s32 %s207, %s208
        %s210 = smul.addr %s209, 8
        %s211 = scalar_lea.vmem %s3, %s210
        %s212 = smul.u32 2, %s21
      $region32: #{baseline_temperature_semseg_forward.1} parent=27 // pred_fallthru
        _
    $region28: #{baseline_temperature_semseg_forward.1} parent=5 // pred_fallthru
      _
    %p213 = scmp.le.s32.totalorder 1, %s13
    %p214 = scmp.lt.s32.totalorder %s13, 3
    %p215 = pnand %p213, %p214
    %p216 = pneg %p215
    // Predicated region
    $region33: #{baseline_temperature_semseg_forward.1} parent=5 // pred_check
      _
    $region34: #{baseline_temperature_semseg_forward.1} parent=5 // pred_check_branch
      %218 = sbr.rel (%p215) target = $region36
    $region35: #{baseline_temperature_semseg_forward.1} parent=5 // pred_region
      %s219 = ssub.s32 %s13, 1
      %p220 = pneg %p46
      %p221 = pneg %p43
      %p222 = pneg %p67
      %p223 = pneg %p64
      %p224 = pneg %p88
      %p225 = pneg %p85
      %s226 = smul.u32 2, %s23
      %p227 = scmp.lt.s32.totalorder %s22, 1
      %s228 = scalar_select %p227, %s22, 1
      %p229 = scmp.lt.s32.totalorder %s226, 1
      %s230 = scalar_select %p229, %s226, 1
      %s231 = smul.addr %s228, 32
      %s232 = sadd.s32 %s230, %s231
      %s233 = smul.addr %s232, 8
      %s234 = scalar_lea.vmem %s3, %s233
      %p235 = pneg %p116
      %p236 = pneg %p113
      %p237 = pneg %p144
      %p238 = pneg %p141
      %s239 = smul.u32 2, %s23
      %p240 = scmp.lt.s32.totalorder %s22, 1
      %s241 = scalar_select %p240, %s22, 1
      %p242 = scmp.lt.s32.totalorder %s239, 1
      %s243 = scalar_select %p242, %s239, 1
      %s244 = smul.addr %s241, 2
      %s245 = sadd.s32 %s243, %s244
      %s246 = smul.addr %s245, 8
      %s247 = scalar_lea.vmem %s4, %s246
      %p248 = pneg %p172
      %p249 = pneg %p169
      %s250 = smul.u32 2, %s23
      %p251 = scmp.lt.s32.totalorder %s22, 1
      %s252 = scalar_select %p251, %s22, 1
      %p253 = scmp.lt.s32.totalorder %s250, 1
      %s254 = scalar_select %p253, %s250, 1
      %s255 = smul.addr %s252, 2
      %s256 = sadd.s32 %s254, %s255
      %s257 = smul.addr %s256, 8
      %s258 = scalar_lea.vmem %s5, %s257
      %s259 = smul.u32 2, %s23
      %p260 = scmp.lt.s32.totalorder %s22, 1
      %s261 = scalar_select %p260, %s22, 1
      %p262 = scmp.lt.s32.totalorder %s259, 1
      %s263 = scalar_select %p262, %s259, 1
      %s264 = smul.addr %s261, 32
      %s265 = sadd.s32 %s263, %s264
      %s266 = smul.addr %s265, 8
      %s267 = scalar_lea.vmem %s3, %s266
      %s268 = smul.u32 2, %s23
      %s269 = smul.u32 2, %s23
      %p270 = scmp.lt.s32.totalorder %s22, 1
      %s271 = scalar_select %p270, %s22, 1
      %p272 = scmp.lt.s32.totalorder %s269, 1
      %s273 = scalar_select %p272, %s269, 1
      %s274 = smul.addr %s271, 2
      %s275 = sadd.s32 %s273, %s274
      %s276 = smul.addr %s275, 8
      %s277 = scalar_lea.vmem %s4, %s276
      %s278 = smul.u32 2, %s23
      %s279 = smul.u32 2, %s23
      %p280 = scmp.lt.s32.totalorder %s22, 1
      %s281 = scalar_select %p280, %s22, 1
      %p282 = scmp.lt.s32.totalorder %s279, 1
      %s283 = scalar_select %p282, %s279, 1
      %s284 = smul.addr %s281, 2
      %s285 = sadd.s32 %s283, %s284
      %s286 = smul.addr %s285, 8
      %s287 = scalar_lea.vmem %s5, %s286
      %s288 = smul.u32 2, %s23
      %s289 = sld [smem:[#allocation2]]
      %v290 = vld [vmem:[%s1] sm:$0xff]
      %v291 = vld [vmem:[%s2] sm:$0xff]
      %v292 = vld [vmem:[%s267] sm:$0xff]
      %v293 = vld [vmem:[%s267 + $0x8] sm:$0xff]
      %v294 = vld [vmem:[%s267 + $0x10] sm:$0xff]
      %v295 = vld [vmem:[%s267 + $0x18] sm:$0xff]
      %v296 = vld [vmem:[%s267 + $0x20] sm:$0xff]
      %v297 = vld [vmem:[%s267 + $0x28] sm:$0xff]
      %v298 = vld [vmem:[%s267 + $0x30] sm:$0xff]
      %v299 = vld [vmem:[%s267 + $0x38] sm:$0xff]
      %v300 = vld [vmem:[%s267 + $0x40] sm:$0xff]
      %v301 = vld [vmem:[%s267 + $0x48] sm:$0xff]
      %v302 = vld [vmem:[%s267 + $0x50] sm:$0xff]
      %v303 = vld [vmem:[%s267 + $0x58] sm:$0xff]
      %v304 = vld [vmem:[%s267 + $0x60] sm:$0xff]
      %v305 = vld [vmem:[%s267 + $0x68] sm:$0xff]
      %v306 = vld [vmem:[%s267 + $0x70] sm:$0xff]
      %v307 = vld [vmem:[%s267 + $0x78] sm:$0xff]
      %v308 = vld [vmem:[%s267 + $0x80] sm:$0xff]
      %v309 = vld [vmem:[%s267 + $0x88] sm:$0xff]
      %v310 = vld [vmem:[%s267 + $0x90] sm:$0xff]
      %v311 = vld [vmem:[%s267 + $0x98] sm:$0xff]
      %v312 = vld [vmem:[%s267 + $0xa0] sm:$0xff]
      %v313 = vld [vmem:[%s267 + $0xa8] sm:$0xff]
      %v314 = vld [vmem:[%s267 + $0xb0] sm:$0xff]
      %v315 = vld [vmem:[%s267 + $0xb8] sm:$0xff]
      %v316 = vld [vmem:[%s267 + $0xc0] sm:$0xff]
      %v317 = vld [vmem:[%s267 + $0xc8] sm:$0xff]
      %v318 = vld [vmem:[%s267 + $0xd0] sm:$0xff]
      %v319 = vld [vmem:[%s267 + $0xd8] sm:$0xff]
      %v320 = vld [vmem:[%s267 + $0xe0] sm:$0xff]
      %v321 = vld [vmem:[%s267 + $0xe8] sm:$0xff]
      %v322 = vld [vmem:[%s267 + $0xf0] sm:$0xff]
      %v323 = vld [vmem:[%s267 + $0xf8] sm:$0xff]
      %325 = vset.pattern.permute.xlu0 0
      %326 = vperm.xlu0 %325, %v291
      %v327 = vpop.permute.xlu0 %326
      %329 = vmatprep.subr.mxu0 %v323
      %330 = vmatpush1.msra.mxu0 %v322
      %331 = vmatprep.subr.mxu0 %v321
      %332 = vmatpush1.msra.mxu0 %v320
      %333 = vmatprep.subr.mxu0 %v319
      %334 = vmatpush1.msra.mxu0 %v318
      %335 = vmatprep.subr.mxu0 %v317
      %336 = vmatpush1.msra.mxu0 %v316
      %337 = vmatprep.subr.mxu0 %v315
      %338 = vmatpush1.msra.mxu0 %v314
      %339 = vmatprep.subr.mxu0 %v313
      %340 = vmatpush1.msra.mxu0 %v312
      %341 = vmatprep.subr.mxu0 %v311
      %342 = vmatpush1.msra.mxu0 %v310
      %343 = vmatprep.subr.mxu0 %v309
      %344 = vmatpush1.msra.mxu0 %v308
      %345 = vmatprep.subr.mxu0 %v307
      %346 = vmatpush1.msra.mxu0 %v306
      %347 = vmatprep.subr.mxu0 %v305
      %348 = vmatpush1.msra.mxu0 %v304
      %349 = vmatprep.subr.mxu0 %v303
      %350 = vmatpush1.msra.mxu0 %v302
      %351 = vmatprep.subr.mxu0 %v301
      %352 = vmatpush1.msra.mxu0 %v300
      %353 = vmatprep.subr.mxu0 %v299
      %354 = vmatpush1.msra.mxu0 %v298
      %355 = vmatprep.subr.mxu0 %v297
      %356 = vmatpush1.msra.mxu0 %v296
      %357 = vmatprep.subr.mxu0 %v295
      %358 = vmatpush1.msra.mxu0 %v294
      %359 = vmatprep.subr.mxu0 %v293
      %360 = vmatpush1.msra.mxu0 %v292
      %361 = vmatprep.subr.mxu0 0.0
      %362 = vmatpush2.msra.mxu0 0.0
      %363 = vmatprep.subr.mxu0 0.0
      %364 = vmatpush2.msra.mxu0 0.0
      %365 = vmatprep.subr.mxu0 0.0
      %366 = vmatpush2.msra.mxu0 0.0
      %367 = vmatprep.subr.mxu0 0.0
      %368 = vmatpush2.msra.mxu0 0.0
      %369 = vmatprep.subr.mxu0 0.0
      %370 = vmatpush2.msra.mxu0 0.0
      %371 = vmatprep.subr.mxu0 0.0
      %372 = vmatpush2.msra.mxu0 0.0
      %373 = vmatprep.subr.mxu0 0.0
      %374 = vmatpush2.msra.mxu0 0.0
      %375 = vmatprep.subr.mxu0 0.0
      %376 = vmatpush2.msra.mxu0 0.0
      %377 = vmatprep.subr.mxu0 0.0
      %378 = vmatpush2.msra.mxu0 0.0
      %379 = vmatprep.subr.mxu0 0.0
      %380 = vmatpush2.msra.mxu0 0.0
      %381 = vmatprep.subr.mxu0 0.0
      %382 = vmatpush2.msra.mxu0 0.0
      %383 = vmatprep.subr.mxu0 0.0
      %384 = vmatpush2.msra.mxu0 0.0
      %385 = vmatprep.subr.mxu0 0.0
      %386 = vmatpush2.msra.mxu0 0.0
      %387 = vmatprep.subr.mxu0 0.0
      %388 = vmatpush2.msra.mxu0 0.0
      %389 = vmatprep.subr.mxu0 0.0
      %390 = vmatpush2.msra.mxu0 0.0
      %391 = vmatprep.subr.mxu0 0.0
      %392 = vmatpush2.msra.mxu0 0.0
      %393 = vmatprep.mubr.f32.mxu0 0.0
      %394 = vmatmul.mubr.f32.gmra.mxu0 %v290
      %v395 = vpop.f32.mrf.mxu0
      %v396 = vadd.f32 %v327, %v395
      %v397 = vpop.f32.mrf.mxu0
      %v398 = vadd.f32 %v327, %v397
      %399 = vdwg.mxu0
      %400 = vst [vmem:[%s287] sm:$0xff] %v396
      %401 = vst [vmem:[%s287 + $0x8] sm:$0xff] %v398
      %v402 = vstv %s289
      %v403 = vmul.f32 %v396, %v402
      %v404 = vmul.f32 %v398, %v402
      %405 = vst [vmem:[%s277] sm:$0xff] %v403
      %406 = vst [vmem:[%s277 + $0x8] sm:$0xff] %v404
      %s407 = smul.u32 2, %s23
      %p408 = scmp.lt.s32.totalorder %s22, 1
      %s409 = scalar_select %p408, %s22, 1
      %p410 = scmp.lt.s32.totalorder %s407, 1
      %s411 = scalar_select %p410, %s407, 1
      %s412 = smul.addr %s409, 2
      %s413 = sadd.s32 %s411, %s412
      %s414 = smul.addr %s413, 8
      %s415 = scalar_lea.vmem %s4, %s414
      %s416 = smul.u32 2, %s23
      %p417 = scmp.lt.s32.totalorder %s22, 1
      %s418 = scalar_select %p417, %s22, 1
      %p419 = scmp.lt.s32.totalorder %s416, 1
      %s420 = scalar_select %p419, %s416, 1
      %s421 = smul.addr %s418, 2
      %s422 = sadd.s32 %s420, %s421
      %s423 = smul.addr %s422, 8
      %s424 = scalar_lea.vmem %s5, %s423
      // Predicated region
      $region37: #{baseline_temperature_semseg_forward.1} parent=35 // pred_check
        %p425 = pneg %p141
      $region38: #{baseline_temperature_semseg_forward.1} parent=35 // pred_check_branch
        %427 = sbr.rel (%p425) target = $region40
      $region39: #{baseline_temperature_semseg_forward.1} parent=35 // pred_region
        %s428 = smul.u32 2, %s23
      $region40: #{baseline_temperature_semseg_forward.1} parent=35 // pred_fallthru
        _
      // Predicated region
      $region41: #{baseline_temperature_semseg_forward.1} parent=35 // pred_check
        %p429 = pneg %p169
      $region42: #{baseline_temperature_semseg_forward.1} parent=35 // pred_check_branch
        %431 = sbr.rel (%p429) target = $region44
      $region43: #{baseline_temperature_semseg_forward.1} parent=35 // pred_region
        %s432 = smul.u32 2, %s23
      $region44: #{baseline_temperature_semseg_forward.1} parent=35 // pred_fallthru
        _
    $region36: #{baseline_temperature_semseg_forward.1} parent=5 // pred_fallthru
      _
    %p433 = scmp.le.s32.totalorder 2, %s13
    // Predicated region
    $region45: #{baseline_temperature_semseg_forward.1} parent=5 // pred_check
      %p434 = pneg %p433
    $region46: #{baseline_temperature_semseg_forward.1} parent=5 // pred_check_branch
      %436 = sbr.rel (%p434) target = $region48
    $region47: #{baseline_temperature_semseg_forward.1} parent=5 // pred_region
      %s437 = ssub.s32 %s13, 2
      // Predicated region
      $region49: #{baseline_temperature_semseg_forward.1} parent=47 // pred_check
        %p438 = pneg %p147
      $region50: #{baseline_temperature_semseg_forward.1} parent=47 // pred_check_branch
        %440 = sbr.rel (%p438) target = $region52
      $region51: #{baseline_temperature_semseg_forward.1} parent=47 // pred_region
        %s441 = smul.u32 2, %s25
        %p442 = scmp.lt.s32.totalorder %s24, 1
        %s443 = scalar_select %p442, %s24, 1
        %p444 = scmp.lt.s32.totalorder %s441, 1
        %s445 = scalar_select %p444, %s441, 1
        %s446 = smul.addr %s443, 2
        %s447 = sadd.s32 %s445, %s446
        %s448 = smul.addr %s447, 8
        %s449 = scalar_lea.vmem %s4, %s448
      $region52: #{baseline_temperature_semseg_forward.1} parent=47 // pred_fallthru
        _
      // Predicated region
      $region53: #{baseline_temperature_semseg_forward.1} parent=47 // pred_check
        %p450 = pneg %p175
      $region54: #{baseline_temperature_semseg_forward.1} parent=47 // pred_check_branch
        %452 = sbr.rel (%p450) target = $region56
      $region55: #{baseline_temperature_semseg_forward.1} parent=47 // pred_region
        %s453 = smul.u32 2, %s25
        %p454 = scmp.lt.s32.totalorder %s24, 1
        %s455 = scalar_select %p454, %s24, 1
        %p456 = scmp.lt.s32.totalorder %s453, 1
        %s457 = scalar_select %p456, %s453, 1
        %s458 = smul.addr %s455, 2
        %s459 = sadd.s32 %s457, %s458
        %s460 = smul.addr %s459, 8
        %s461 = scalar_lea.vmem %s5, %s460
      $region56: #{baseline_temperature_semseg_forward.1} parent=47 // pred_fallthru
        _
    $region48: #{baseline_temperature_semseg_forward.1} parent=5 // pred_fallthru
      _
  $region6: #{baseline_temperature_semseg_forward.1} parent=0 // loop_footer
    %s17 = sadd.s32 1, %s13
  $region7: #{baseline_temperature_semseg_forward.1} parent=0 // loop_footer_branch
    %12 = sbr.rel target = $region3
  $region8: #{baseline_temperature_semseg_forward.1} parent=0 // loop_exit
    _

</llo_original>
